<compile_context>
chip_gen: v7x
topology: tpu7x:2x2x1
jax: 0.10.0
libtpu: 0.0.40
codegen_flags: <defaults>
</compile_context>

<pallas_src>
import jax
import jax.numpy as jnp
from jax.experimental import pallas as pl
from jax.experimental.pallas import tpu as pltpu


def _round_up(x, m):
    return (x + m - 1) // m * m


def _embedder_kernel(x_ref, p_ref, out_ref):
    # x_ref:   (3, block_rows, 1)  planes: [x-coord, y-coord, bos_indicator]
    # p_ref:   (8, d_pad)          rows:   [w_x, w_y, bos - bias, bias, 0...]
    # out_ref: (block_rows, d_pad)
    #
    # out[r, :] = x[r]*w_x + y[r]*w_y + bos_ind[r]*(bos - bias) + bias
    # Pure VPU (3 vmul + 3 vadd per output vreg), no MXU, one slab store.
    out_ref[...] = (
        x_ref[0] * p_ref[0:1, :]
        + x_ref[1] * p_ref[1:2, :]
        + x_ref[2] * p_ref[2:3, :]
        + p_ref[3:4, :]
    ).astype(out_ref.dtype)


def embedder_forward(tgt_seq, cp_weight, cp_bias, bos_weight,
                     out_dtype=jnp.float32):
    """
    tgt_seq:    (num_cp, batch, 2)  float32
    cp_weight:  (d_model, 2)        float32   (PyTorch nn.Linear weight layout)
    cp_bias:    (d_model,)          float32
    bos_weight: (1, d_model)        float32   (nn.Embedding(1, d_model) table)
    returns:    (1 + num_cp, batch, d_model) out_dtype
    """
    num_cp, batch, two = tgt_seq.shape
    assert two == 2
    d_model = cp_weight.shape[0]
    f32 = jnp.float32

    n_cp_rows = num_cp * batch
    rows = (1 + num_cp) * batch            # fused (seq, batch) row axis
    rows_pad = _round_up(rows, 8)          # sublane-aligned
    d_pad = _round_up(d_model, 128)        # lane-dense output / params
    pad_tail = rows_pad - rows

    # ---- wrapper-side layout plumbing (tiny, one-time XLA ops) --------------
    coords = tgt_seq.astype(f32).reshape(n_cp_rows, 2)
    zb = jnp.zeros((batch,), f32)
    zt = jnp.zeros((pad_tail,), f32)

    planes = jnp.stack(
        [
            jnp.concatenate([zb, coords[:, 0], zt]),                       # x (0 for BOS / pad)
            jnp.concatenate([zb, coords[:, 1], zt]),                       # y (0 for BOS / pad)
            jnp.concatenate([jnp.ones((batch,), f32),
                             jnp.zeros((n_cp_rows + pad_tail,), f32)]),    # BOS indicator
        ]
    ).reshape(3, rows_pad, 1)

    # Parameter slab: one full (8, d_pad) tile, lane-dense.
    w_x = cp_weight[:, 0].astype(f32)
    w_y = cp_weight[:, 1].astype(f32)
    bias = cp_bias.reshape(d_model).astype(f32)
    bos = bos_weight.reshape(d_model).astype(f32)
    params4 = jnp.stack([w_x, w_y, bos - bias, bias])          # (4, d_model)
    params = jnp.zeros((8, d_pad), f32).at[:4, :d_model].set(params4)

    # ---- tiling / grid ------------------------------------------------------
    # Lane-padded (block_rows, 1) planes cost ~512 B VMEM per row per plane;
    # cap at 2048 rows so 3 planes x 2 buffers + output tile stays well under
    # v7x's 64 MiB.  For large rows, target >= 2 grid steps so "parallel" can
    # shard across both v7x TensorCores (no effect on v5e/v6e or at toy size).
    MAX_BLOCK_ROWS = 2048
    if rows_pad <= 512:
        block_rows = rows_pad
    else:
        block_rows = min(MAX_BLOCK_ROWS, _round_up(pl.cdiv(rows_pad, 2), 8))
    grid = (pl.cdiv(rows_pad, block_rows),)

    out2d = pl.pallas_call(
        _embedder_kernel,
        out_shape=jax.ShapeDtypeStruct((rows_pad, d_pad), out_dtype),
        grid=grid,
        in_specs=[
            pl.BlockSpec((3, block_rows, 1), lambda i: (0, i, 0)),
            pl.BlockSpec((8, d_pad), lambda i: (0, 0)),
        ],
        out_specs=pl.BlockSpec((block_rows, d_pad), lambda i: (i, 0)),
        compiler_params=pltpu.CompilerParams(
            dimension_semantics=("parallel",),
            vmem_limit_bytes=32 << 20,
        ),
    )(planes, params)

    # Drop padding (no-op at the demo shape) and restore PyTorch layout
    # (contiguous, free reshape).
    out2d = out2d[:rows, :d_model]
    return out2d.reshape(1 + num_cp, batch, d_model)


def _reference(tgt_seq, cp_weight, cp_bias, bos_weight):
    num_cp, batch, _ = tgt_seq.shape
    d_model = cp_weight.shape[0]
    lin = jnp.einsum("nbk,dk->nbd", tgt_seq, cp_weight) + cp_bias
    row0 = jnp.broadcast_to(bos_weight.reshape(1, 1, d_model), (1, batch, d_model))
    return jnp.concatenate([row0, lin], axis=0).astype(jnp.float32)


if __name__ == "__main__":
    num_cp, batch, d_model = 5, 8, 128   # d_model multiple of 128 -> lane-dense output

    key = jax.random.PRNGKey(0)
    k1, k2, k3, k4 = jax.random.split(key, 4)

    tgt_seq = jax.random.normal(k1, (num_cp, batch, 2), dtype=jnp.float32)
    cp_weight = jax.random.normal(k2, (d_model, 2), dtype=jnp.float32) * 0.1
    cp_bias = jax.random.normal(k3, (d_model,), dtype=jnp.float32) * 0.1
    bos_weight = jax.random.normal(k4, (1, d_model), dtype=jnp.float32)

    out = embedder_forward(tgt_seq, cp_weight, cp_bias, bos_weight)
    out = jax.block_until_ready(out)

    ref = _reference(tgt_seq, cp_weight, cp_bias, bos_weight)
    assert out.shape == (1 + num_cp, batch, d_model)
    assert jnp.allclose(out, ref, atol=1e-5, rtol=1e-5)

    print("KERNEL_OK")
</pallas_src>

<mosaic_0001>
module attributes {stable_mosaic.version = 11 : i64} {
  func.func @_embedder_kernel(%arg0: i32, %arg1: memref<3x48x1xf32, #tpu.memory_space<vmem>>, %arg2: memref<8x128xf32, #tpu.memory_space<vmem>>, %arg3: memref<48x128xf32, #tpu.memory_space<vmem>>) attributes {dimension_semantics = [#tpu.dimension_semantics<parallel>], iteration_bounds = array<i64: 1>, scalar_prefetch = 0 : i64, scratch_operands = 0 : i64, tpu.core_type = #tpu.core_type<tc>, window_params = [{transform_indices = @transform_0, window_bounds = array<i64: 3, 48, 1>}, {pipeline_mode = #tpu.pipeline_mode<synchronous>, transform_indices = @transform_1, window_bounds = array<i64: 8, 128>}, {transform_indices = @transform_2, window_bounds = array<i64: 48, 128>}]} {
    %c0 = arith.constant 0 : index
    %c0_0 = arith.constant 0 : index
    %c0_1 = arith.constant 0 : index
    %0 = vector.load %arg1[%c0, %c0_0, %c0_1] : memref<3x48x1xf32, #tpu.memory_space<vmem>>, vector<1x48x1xf32>
    %1 = vector.shape_cast %0 : vector<1x48x1xf32> to vector<48x1xf32>
    %c0_2 = arith.constant 0 : index
    %c0_3 = arith.constant 0 : index
    %2 = vector.load %arg2[%c0_2, %c0_3] : memref<8x128xf32, #tpu.memory_space<vmem>>, vector<1x128xf32>
    %3 = vector.broadcast %1 : vector<48x1xf32> to vector<48x128xf32>
    %4 = vector.broadcast %2 : vector<1x128xf32> to vector<48x128xf32>
    %5 = arith.mulf %3, %4 : vector<48x128xf32>
    %c1 = arith.constant 1 : index
    %c0_4 = arith.constant 0 : index
    %c0_5 = arith.constant 0 : index
    %6 = vector.load %arg1[%c1, %c0_4, %c0_5] : memref<3x48x1xf32, #tpu.memory_space<vmem>>, vector<1x48x1xf32>
    %7 = vector.shape_cast %6 : vector<1x48x1xf32> to vector<48x1xf32>
    %c1_6 = arith.constant 1 : index
    %c0_7 = arith.constant 0 : index
    %8 = vector.load %arg2[%c1_6, %c0_7] : memref<8x128xf32, #tpu.memory_space<vmem>>, vector<1x128xf32>
    %9 = vector.broadcast %7 : vector<48x1xf32> to vector<48x128xf32>
    %10 = vector.broadcast %8 : vector<1x128xf32> to vector<48x128xf32>
    %11 = arith.mulf %9, %10 : vector<48x128xf32>
    %12 = arith.addf %5, %11 : vector<48x128xf32>
    %c2 = arith.constant 2 : index
    %c0_8 = arith.constant 0 : index
    %c0_9 = arith.constant 0 : index
    %13 = vector.load %arg1[%c2, %c0_8, %c0_9] : memref<3x48x1xf32, #tpu.memory_space<vmem>>, vector<1x48x1xf32>
    %14 = vector.shape_cast %13 : vector<1x48x1xf32> to vector<48x1xf32>
    %c2_10 = arith.constant 2 : index
    %c0_11 = arith.constant 0 : index
    %15 = vector.load %arg2[%c2_10, %c0_11] : memref<8x128xf32, #tpu.memory_space<vmem>>, vector<1x128xf32>
    %16 = vector.broadcast %14 : vector<48x1xf32> to vector<48x128xf32>
    %17 = vector.broadcast %15 : vector<1x128xf32> to vector<48x128xf32>
    %18 = arith.mulf %16, %17 : vector<48x128xf32>
    %19 = arith.addf %12, %18 : vector<48x128xf32>
    %c3 = arith.constant 3 : index
    %c0_12 = arith.constant 0 : index
    %20 = vector.load %arg2[%c3, %c0_12] : memref<8x128xf32, #tpu.memory_space<vmem>>, vector<1x128xf32>
    %21 = vector.broadcast %20 : vector<1x128xf32> to vector<48x128xf32>
    %22 = arith.addf %19, %21 : vector<48x128xf32>
    %c0_13 = arith.constant 0 : index
    %c0_14 = arith.constant 0 : index
    %23 = vector.load %arg3[%c0_13, %c0_14] : memref<48x128xf32, #tpu.memory_space<vmem>>, vector<48x128xf32>
    tpu.vector_store %arg3[%c0_13, %c0_14], %22 {strides = array<i32>} : memref<48x128xf32, #tpu.memory_space<vmem>>, vector<48x128xf32>,
    return
  }
  func.func @transform_0(%arg0: i32) -> (i32, i32, i32) {
    %c0_i32 = arith.constant 0 : i32
    %c0_i32_0 = arith.constant 0 : i32
    %c0_i32_1 = arith.constant 0 : i32
    return %c0_i32, %arg0, %c0_i32_0 : i32, i32, i32
  }
  func.func @transform_1(%arg0: i32) -> (i32, i32) {
    %c0_i32 = arith.constant 0 : i32
    %c0_i32_0 = arith.constant 0 : i32
    %c0_i32_1 = arith.constant 0 : i32
    return %c0_i32, %c0_i32_0 : i32, i32
  }
  func.func @transform_2(%arg0: i32) -> (i32, i32) {
    %c0_i32 = arith.constant 0 : i32
    %c0_i32_0 = arith.constant 0 : i32
    return %arg0, %c0_i32 : i32, i32
  }
}

</mosaic_0001>

<llo_original>
// kernel: tpu_custom_call.1
$region0: #{tpu_custom_call.1}
  #allocation0 [shape = 'u32[]', space=smem, size = 0x4, offset = 0x4, fixed_abs, tag = 'smem constant byte address 0x4 - core index']
  #allocation1 [shape = 'u32[144,128]{1,0:T(1,128)}', space=vmem, size = 0x12000, scoped, tag = 'internal scratch']
  %s0 = inlined_call_operand.vmem [shape: f32[3,48,1], index: 0, kind: input, shape index: {}]
  %s1 = inlined_call_operand.vmem [shape: f32[8,128], index: 1, kind: input, shape index: {}]
  %s2 = inlined_call_operand.hbm [shape: f32[48,128], index: 2, kind: output, shape index: {}]
  %s3 = sld [smem:[#allocation0]]
  $region18: #{tpu_custom_call.1} parent=0
    _
  %s5 = ssub.s32 1, %s3
  %s6 = scalar_select 0, %s5, %s3
  $region1: #{tpu_custom_call.1} parent=0
    #allocation2 [shape = 'u8[24576]{0}', space=vmem, size = 0x6000, scoped, tag = 'output window, operand 0, single buffered']
    #allocation3 [shape = 's32[1]{0}', space=sflag, size = 0x4, scoped, tag = 'scoped memory for tpu_custom_call.1']
    %7 = vsyncpa [#allocation3], 0
    // Predicated region
    $region2: #{tpu_custom_call.1} parent=1 // pred_check
      _
    $region3: #{tpu_custom_call.1} parent=1 // pred_check_branch
      %9 = sbr.rel (0) target = $region5
    $region4: #{tpu_custom_call.1} parent=1 // pred_region
      _
    $region5: #{tpu_custom_call.1} parent=1 // pred_fallthru
      _
    // Predicated region
    $region6: #{tpu_custom_call.1} parent=1 // pred_check
      _
    $region7: #{tpu_custom_call.1} parent=1 // pred_check_branch
      %11 = sbr.rel (0) target = $region9
    $region8: #{tpu_custom_call.1} parent=1 // pred_region
      _
    $region9: #{tpu_custom_call.1} parent=1 // pred_fallthru
      _
    %v12 = vld [vmem:[%s0] sm:$0xff]
    %v13 = vld [vmem:[%s0 + $0x8] sm:$0xff]
    %v14 = vld [vmem:[%s0 + $0x10] sm:$0xff]
    %v15 = vld [vmem:[%s0 + $0x18] sm:$0xff]
    %v16 = vld [vmem:[%s0 + $0x20] sm:$0xff]
    %v17 = vld [vmem:[%s0 + $0x28] sm:$0xff]
    %v18 = vld [vmem:[%s1] sm:$0x1]
    %20 = vset.pattern.permute.xlu0 0
    %21 = vperm.xlu0 %20, %v12
    %v22 = vpop.permute.xlu0 %21
    %25 = vset.pattern.permute.xlu0 0
    %26 = vperm.xlu0 %25, %v13
    %v27 = vpop.permute.xlu0 %26
    %30 = vset.pattern.permute.xlu0 0
    %31 = vperm.xlu0 %30, %v14
    %v32 = vpop.permute.xlu0 %31
    %35 = vset.pattern.permute.xlu0 0
    %36 = vperm.xlu0 %35, %v15
    %v37 = vpop.permute.xlu0 %36
    %40 = vset.pattern.permute.xlu0 0
    %41 = vperm.xlu0 %40, %v16
    %v42 = vpop.permute.xlu0 %41
    %45 = vset.pattern.permute.xlu0 0
    %46 = vperm.xlu0 %45, %v17
    %v47 = vpop.permute.xlu0 %46
    %v49 = vlaneseq
    %v50 = vshrl.u32 %v49, 7
    %v51 = vsub.s32 0, %v50
    %v52 = vrot.slane %v18, %v51
    %v53 = vmul.f32 %v22, %v52
    %v54 = vmul.f32 %v27, %v52
    %v55 = vmul.f32 %v32, %v52
    %v56 = vmul.f32 %v37, %v52
    %v57 = vmul.f32 %v42, %v52
    %v58 = vmul.f32 %v47, %v52
    %s59 = scalar_lea.vmem %s0, 48
    %v60 = vld [vmem:[%s59] sm:$0xff]
    %v61 = vld [vmem:[%s59 + $0x8] sm:$0xff]
    %v62 = vld [vmem:[%s59 + $0x10] sm:$0xff]
    %v63 = vld [vmem:[%s59 + $0x18] sm:$0xff]
    %v64 = vld [vmem:[%s59 + $0x20] sm:$0xff]
    %v65 = vld [vmem:[%s59 + $0x28] sm:$0xff]
    %v66 = vld [vmem:[%s1 + $0x1] sm:$0x1]
    %68 = vset.pattern.permute.xlu0 0
    %69 = vperm.xlu0 %68, %v60
    %v70 = vpop.permute.xlu0 %69
    %73 = vset.pattern.permute.xlu0 0
    %74 = vperm.xlu0 %73, %v61
    %v75 = vpop.permute.xlu0 %74
    %78 = vset.pattern.permute.xlu0 0
    %79 = vperm.xlu0 %78, %v62
    %v80 = vpop.permute.xlu0 %79
    %83 = vset.pattern.permute.xlu0 0
    %84 = vperm.xlu0 %83, %v63
    %v85 = vpop.permute.xlu0 %84
    %88 = vset.pattern.permute.xlu0 0
    %89 = vperm.xlu0 %88, %v64
    %v90 = vpop.permute.xlu0 %89
    %93 = vset.pattern.permute.xlu0 0
    %94 = vperm.xlu0 %93, %v65
    %v95 = vpop.permute.xlu0 %94
    %v97 = vlaneseq
    %v98 = vshrl.u32 %v97, 7
    %v99 = vsub.s32 0, %v98
    %v100 = vrot.slane %v66, %v99
    %v101 = vmul.f32 %v70, %v100
    %v102 = vmul.f32 %v75, %v100
    %v103 = vmul.f32 %v80, %v100
    %v104 = vmul.f32 %v85, %v100
    %v105 = vmul.f32 %v90, %v100
    %v106 = vmul.f32 %v95, %v100
    %v107 = vadd.f32 %v53, %v101
    %v108 = vadd.f32 %v54, %v102
    %v109 = vadd.f32 %v55, %v103
    %v110 = vadd.f32 %v56, %v104
    %v111 = vadd.f32 %v57, %v105
    %v112 = vadd.f32 %v58, %v106
    %s113 = scalar_lea.vmem %s0, 96
    %v114 = vld [vmem:[%s113] sm:$0xff]
    %v115 = vld [vmem:[%s113 + $0x8] sm:$0xff]
    %v116 = vld [vmem:[%s113 + $0x10] sm:$0xff]
    %v117 = vld [vmem:[%s113 + $0x18] sm:$0xff]
    %v118 = vld [vmem:[%s113 + $0x20] sm:$0xff]
    %v119 = vld [vmem:[%s113 + $0x28] sm:$0xff]
    %v120 = vld [vmem:[%s1 + $0x2] sm:$0x1]
    %122 = vset.pattern.permute.xlu0 0
    %123 = vperm.xlu0 %122, %v114
    %v124 = vpop.permute.xlu0 %123
    %127 = vset.pattern.permute.xlu0 0
    %128 = vperm.xlu0 %127, %v115
    %v129 = vpop.permute.xlu0 %128
    %132 = vset.pattern.permute.xlu0 0
    %133 = vperm.xlu0 %132, %v116
    %v134 = vpop.permute.xlu0 %133
    %137 = vset.pattern.permute.xlu0 0
    %138 = vperm.xlu0 %137, %v117
    %v139 = vpop.permute.xlu0 %138
    %142 = vset.pattern.permute.xlu0 0
    %143 = vperm.xlu0 %142, %v118
    %v144 = vpop.permute.xlu0 %143
    %147 = vset.pattern.permute.xlu0 0
    %148 = vperm.xlu0 %147, %v119
    %v149 = vpop.permute.xlu0 %148
    %v151 = vlaneseq
    %v152 = vshrl.u32 %v151, 7
    %v153 = vsub.s32 0, %v152
    %v154 = vrot.slane %v120, %v153
    %v155 = vmul.f32 %v124, %v154
    %v156 = vmul.f32 %v129, %v154
    %v157 = vmul.f32 %v134, %v154
    %v158 = vmul.f32 %v139, %v154
    %v159 = vmul.f32 %v144, %v154
    %v160 = vmul.f32 %v149, %v154
    %v161 = vadd.f32 %v107, %v155
    %v162 = vadd.f32 %v108, %v156
    %v163 = vadd.f32 %v109, %v157
    %v164 = vadd.f32 %v110, %v158
    %v165 = vadd.f32 %v111, %v159
    %v166 = vadd.f32 %v112, %v160
    %v167 = vld [vmem:[%s1 + $0x3] sm:$0x1]
    %v168 = vlaneseq
    %v169 = vshrl.u32 %v168, 7
    %v170 = vsub.s32 0, %v169
    %v171 = vrot.slane %v167, %v170
    %v172 = vadd.f32 %v161, %v171
    %v173 = vadd.f32 %v162, %v171
    %v174 = vadd.f32 %v163, %v171
    %v175 = vadd.f32 %v164, %v171
    %v176 = vadd.f32 %v165, %v171
    %v177 = vadd.f32 %v166, %v171
    %178 = vst [vmem:[#allocation2] sm:$0xff] %v172
    %179 = vst [vmem:[#allocation2 + $0x8] sm:$0xff] %v173
    %180 = vst [vmem:[#allocation2 + $0x10] sm:$0xff] %v174
    %181 = vst [vmem:[#allocation2 + $0x18] sm:$0xff] %v175
    %182 = vst [vmem:[#allocation2 + $0x20] sm:$0xff] %v176
    %183 = vst [vmem:[#allocation2 + $0x28] sm:$0xff] %v177
    // Predicated region
    $region10: #{tpu_custom_call.1} parent=1 // pred_check
      _
    $region11: #{tpu_custom_call.1} parent=1 // pred_check_branch
      %185 = sbr.rel (0) target = $region13
    $region12: #{tpu_custom_call.1} parent=1 // pred_region
      %s187 = ssub.s32 768, 768
      %188 = vsyncadd [#allocation3], %s187
      %s189 = sshll.u32 [#allocation2], 4
      %s190 = int_to_ptr.vmem [resolvable:$true] %s189
      %195 = dma.vmem_to_hbm [thread:$0]  %s190, 768, %s2, [#allocation3], 128, 128, 8
    $region13: #{tpu_custom_call.1} parent=1 // pred_fallthru
      _
    // Predicated region
    $region14: #{tpu_custom_call.1} parent=1 // pred_check
      _
    $region15: #{tpu_custom_call.1} parent=1 // pred_check_branch
      %197 = sbr.rel (0) target = $region17
    $region16: #{tpu_custom_call.1} parent=1 // pred_region
      %198 = dma.done [#allocation3], 768
    $region17: #{tpu_custom_call.1} parent=1 // pred_fallthru
      _
    %199 = vsyncpa [#allocation3], 1

</llo_original>
